<compile_context>
chip_gen: v7x
topology: tpu7x:2x2x1
jax: 0.10.0
libtpu: 0.0.40
codegen_flags: <defaults>
</compile_context>

<pallas_src>
import functools
import numpy as np
import jax
import jax.numpy as jnp
from jax.experimental import pallas as pl
from jax.experimental.pallas import tpu as pltpu


def _dino_loss_kernel(inv_temp_ref, teacher_ref, student_ref, center_ref,
                      loss_ref, center_part_ref, q_scr, acc_scr,
                      *, ncrops, tb, inv_student_temp):
    v = pl.program_id(1)          # crop index (innermost, "arbitrary")

    # ---- once per batch tile (first crop step): teacher softmax + center column sum ----
    @pl.when(v == 0)
    def _teacher_phase():
        inv_temp = inv_temp_ref[0, 0]
        center = center_ref[...].astype(jnp.float32)              # (1, D)
        t0 = teacher_ref[0].astype(jnp.float32)                   # (tb, D)
        t1 = teacher_ref[1].astype(jnp.float32)

        def _softmax(t):
            z = (t - center) * inv_temp
            z = z - jnp.max(z, axis=-1, keepdims=True)
            e = jnp.exp(z)
            # Exact reciprocal on purpose: the rowsum(q)==1 identity in the crop loop
            # needs an accurately normalized q, and this runs once per tile only.
            return e * pl.reciprocal(jnp.sum(e, axis=-1, keepdims=True), approx=False)

        q0 = _softmax(t0)
        q1 = _softmax(t1)
        q_scr[0] = q0 + q1            # q_sum, used by every crop step
        q_scr[1] = q0                 # exclusion term at v == 0
        q_scr[2] = q1                 # exclusion term at v == 1
        acc_scr[...] = jnp.zeros_like(acc_scr)

        # Teacher column sum for the center EMA, kept 8-sublane dense (full-vreg adds);
        # the 8 -> 1 sublane collapse happens in plain JAX after the kernel.
        D = t0.shape[-1]
        if tb % 8 == 0:
            csum = jnp.zeros((8, D), jnp.float32)
            for j in range(tb // 8):
                csum = csum + t0[j * 8:(j + 1) * 8, :] + t1[j * 8:(j + 1) * 8, :]
        else:
            csum = jnp.zeros((8, D), jnp.float32).at[0:1, :].set(
                jnp.sum(t0 + t1, axis=0, keepdims=True))
        center_part_ref[0] = csum

    # ---- every crop step: streamed student statistics (no log-prob materialization) ----
    # Per row:  <q, log_softmax(s)> = <q, s> - rowmax(s) - log(sum(exp(s - rowmax)))
    s = student_ref[0].astype(jnp.float32) * inv_student_temp      # (tb, D)
    m = jnp.max(s, axis=-1, keepdims=True)                         # (tb, 1)
    logz = jnp.log(jnp.sum(jnp.exp(s - m), axis=-1, keepdims=True))  # (tb, 1)
    dsum = jnp.sum(q_scr[0] * s, axis=-1, keepdims=True)           # <q0+q1, s>, (tb, 1)
    base = dsum - 2.0 * (m + logz)                                 # (tb, 1)

    @pl.when(v < 2)
    def _with_exclusion():   # student crop v coincides with teacher view v: drop that pair
        d_ex = jnp.sum(q_scr[1 + v] * s, axis=-1, keepdims=True)
        acc_scr[...] = acc_scr[...] + (base - (d_ex - (m + logz)))

    @pl.when(v >= 2)
    def _plain():
        acc_scr[...] = acc_scr[...] + base

    # ---- once per batch tile (last crop step): single scalar reduce + store ----
    @pl.when(v == ncrops - 1)
    def _finalize():
        total = jnp.sum(acc_scr[...])
        loss_ref[0] = jnp.broadcast_to(total, (8, 128))


def _vmem_budgets():
    """Returns (tiling budget for _pick_tile_b, vmem_limit_bytes), per TPU generation."""
    cap = 128 * 1024 * 1024
    try:
        cap = int(getattr(pltpu.get_tpu_info(), "vmem_capacity_bytes", cap))
    except Exception:
        pass                                             # fall back to 128 MiB assumption
    if cap <= 64 * 1024 * 1024:                          # v7x-class: 64 MiB / TensorCore
        return 22 * 1024 * 1024, 40 * 1024 * 1024
    return 64 * 1024 * 1024, 96 * 1024 * 1024            # v5e / v6e: 128 MiB


def _pick_tile_b(B, D, itemsize, budget_bytes):
    """Largest sublane-aligned divisor of B fitting the VMEM budget (never the whole B
    as an overflow fallback)."""
    # Per batch-row bytes:
    #   teacher block (2, tb, D) double-buffered  -> 4*D*itemsize
    #   student block (1, tb, D) double-buffered  -> 2*D*itemsize
    #   q scratch     (3, tb, D) f32              -> 12*D
    #   live f32 intermediates (~6 rows)          -> 24*D
    per_row = 6 * D * itemsize + 36 * D
    fixed = 2 * (8 * 128 + 8 * D + D) * 4                # partial outputs + center input
    avail = max(0, budget_bytes - fixed)
    max_tb = max(1, avail // per_row)
    if B <= max_tb:
        return B
    best = None
    tb = 8
    while tb <= max_tb:
        if B % tb == 0:
            best = tb
        tb += 8
    if best is not None:
        return best
    # Nothing aligned fits: best-effort smallest legal tile instead of blowing VMEM.
    # TODO(synk): add lane (D) tiling for extreme out_dim / tiny-VMEM combinations.
    return 8 if B % 8 == 0 else B


@functools.partial(
    jax.jit,
    static_argnames=("ncrops", "tb", "inv_student_temp", "center_momentum", "vmem_limit"))
def _dino_forward(student_output, teacher_output, center, inv_temp, *,
                  ncrops, tb, inv_student_temp, center_momentum, vmem_limit):
    two_b, D = teacher_output.shape
    B = two_b // 2
    n_tiles = B // tb
    teacher3 = teacher_output.reshape(2, B, D)
    student3 = student_output.reshape(ncrops, B, D)

    kernel = functools.partial(_dino_loss_kernel, ncrops=ncrops, tb=tb,
                               inv_student_temp=inv_student_temp)

    loss_part, center_part = pl.pallas_call(
        kernel,
        grid=(n_tiles, ncrops),
        out_shape=(jax.ShapeDtypeStruct((n_tiles, 8, 128), jnp.float32),   # loss partials
                   jax.ShapeDtypeStruct((n_tiles, 8, D), jnp.float32)),    # center partials
        in_specs=[
            pl.BlockSpec(memory_space=pltpu.MemorySpace.SMEM),       # 1/teacher_temp (1,1)
            pl.BlockSpec((2, tb, D), lambda i, v: (0, i, 0)),        # teacher tile (resident over v)
            pl.BlockSpec((1, tb, D), lambda i, v: (v, i, 0)),        # student crop v, streamed
            pl.BlockSpec((1, D), lambda i, v: (0, 0)),               # center (resident)
        ],
        out_specs=(
            pl.BlockSpec((1, 8, 128), lambda i, v: (i, 0, 0)),       # per-tile loss partial
            pl.BlockSpec((1, 8, D), lambda i, v: (i, 0, 0)),         # per-tile center partial
        ),
        scratch_shapes=[
            pltpu.VMEM((3, tb, D), jnp.float32),      # q_sum, q0, q1 (teacher softmax)
            pltpu.VMEM((tb, 1), jnp.float32),         # per-row loss accumulator
        ],
        compiler_params=pltpu.CompilerParams(
            dimension_semantics=("parallel", "arbitrary"),   # tiles parallel (v7x 2 TCs), crops reduce
            vmem_limit_bytes=vmem_limit),
    )(inv_temp, teacher3, student3, center)

    n_terms = 2 * (ncrops - 1)
    loss = -jnp.sum(loss_part[:, 0, 0]) / jnp.float32(B * n_terms)
    batch_center = jnp.sum(center_part, axis=(0, 1)).reshape(1, D) / jnp.float32(2 * B)
    new_center = (center.astype(jnp.float32) * center_momentum
                  + batch_center * (1.0 - center_momentum))
    return loss, new_center


class DINOLoss:
    def __init__(self, out_dim, ncrops, warmup_teacher_temp, teacher_temp,
                 warmup_teacher_temp_epochs, nepochs,
                 student_temp=0.1, center_momentum=0.9, tile_b=None):
        assert ncrops >= 2, "DINO needs at least the two global crops"
        self.student_temp = float(student_temp)
        self.center_momentum = float(center_momentum)
        self.ncrops = int(ncrops)
        self.out_dim = int(out_dim)
        self.tile_b = tile_b
        # buffer 'center' initialized to zeros, as in the torch module
        self.center = jnp.zeros((1, out_dim), jnp.float32)
        self.teacher_temp_schedule = np.concatenate((
            np.linspace(warmup_teacher_temp, teacher_temp, warmup_teacher_temp_epochs),
            np.ones(nepochs - warmup_teacher_temp_epochs) * teacher_temp))
        self._tile_budget, self._vmem_limit = _vmem_budgets()

    def __call__(self, student_output, teacher_output, epoch):
        D = self.out_dim
        ncrops = self.ncrops
        assert teacher_output.shape[0] % 2 == 0
        B = teacher_output.shape[0] // 2
        assert student_output.shape == (ncrops * B, D)
        assert teacher_output.shape == (2 * B, D)

        itemsize = jnp.dtype(student_output.dtype).itemsize
        tb = self.tile_b if self.tile_b is not None else _pick_tile_b(
            B, D, itemsize, self._tile_budget)
        assert B % tb == 0, f"tile_b={tb} must divide per-crop batch B={B}"

        inv_temp = jnp.asarray(
            [[1.0 / float(self.teacher_temp_schedule[epoch])]], dtype=jnp.float32)

        loss, new_center = _dino_forward(
            student_output, teacher_output, self.center, inv_temp,
            ncrops=ncrops, tb=int(tb),
            inv_student_temp=1.0 / self.student_temp,
            center_momentum=self.center_momentum,
            vmem_limit=int(self._vmem_limit))

        self.center = new_center     # buffer update, like register_buffer in torch
        return loss


def _reference(student_output, teacher_output, center, temp,
               ncrops, student_temp, center_momentum):
    """Pure-JAX reference mirroring the PyTorch forward (world_size == 1)."""
    batch = teacher_output.shape[0] // 2
    student_out = student_output / student_temp
    teacher_sm = jax.nn.softmax((teacher_output - center) / temp, axis=-1)
    student_lp = jax.nn.log_softmax(student_out, axis=-1)
    total, n = 0.0, 0
    for iq in range(2):
        q = teacher_sm[iq * batch:(iq + 1) * batch]
        for v in range(ncrops):
            if v == iq:
                continue
            p = student_lp[v * batch:(v + 1) * batch]
            total = total + jnp.mean(jnp.sum(-q * p, axis=-1))
            n += 1
    loss = total / n
    batch_center = jnp.sum(teacher_output, axis=0, keepdims=True) / (2 * batch)
    new_center = center * center_momentum + batch_center * (1 - center_momentum)
    return loss, new_center


if __name__ == "__main__":
    out_dim = 128
    ncrops = 4
    batch = 16          # per-crop batch
    epoch = 3

    key = jax.random.PRNGKey(0)
    k1, k2 = jax.random.split(key)
    student_output = jax.random.normal(k1, (ncrops * batch, out_dim), jnp.float32)
    teacher_output = jax.random.normal(k2, (2 * batch, out_dim), jnp.float32)

    loss_mod = DINOLoss(out_dim=out_dim, ncrops=ncrops,
                        warmup_teacher_temp=0.04, teacher_temp=0.07,
                        warmup_teacher_temp_epochs=5, nepochs=10,
                        tile_b=8)   # 2 batch tiles x 4 crop steps -> exercises both grid axes

    init_center = loss_mod.center
    loss = loss_mod(student_output, teacher_output, epoch)
    loss = jax.block_until_ready(loss)
    new_center = jax.block_until_ready(loss_mod.center)

    ref_loss, ref_center = _reference(
        student_output, teacher_output, init_center,
        float(loss_mod.teacher_temp_schedule[epoch]),
        ncrops, loss_mod.student_temp, loss_mod.center_momentum)

    assert jnp.allclose(loss, ref_loss, rtol=2e-4, atol=2e-4), (loss, ref_loss)
    assert jnp.allclose(new_center, ref_center, rtol=1e-4, atol=1e-5)

    print("KERNEL_OK")
</pallas_src>

<mosaic_0001>
module attributes {stable_mosaic.version = 11 : i64} {
  func.func @_dino_loss_kernel(%arg0: i32, %arg1: i32, %arg2: memref<1x1xf32, #tpu.memory_space<smem>>, %arg3: memref<2x8x128xf32, #tpu.memory_space<vmem>>, %arg4: memref<1x8x128xf32, #tpu.memory_space<vmem>>, %arg5: memref<1x128xf32, #tpu.memory_space<vmem>>, %arg6: memref<1x8x128xf32, #tpu.memory_space<vmem>>, %arg7: memref<1x8x128xf32, #tpu.memory_space<vmem>>, %arg8: memref<3x8x128xf32, #tpu.memory_space<vmem>>, %arg9: memref<8x1xf32, #tpu.memory_space<vmem>>) attributes {dimension_semantics = [#tpu.dimension_semantics<parallel>, #tpu.dimension_semantics<arbitrary>], iteration_bounds = array<i64: 2, 4>, scalar_prefetch = 0 : i64, scratch_operands = 2 : i64, tpu.core_type = #tpu.core_type<tc>, window_params = [{transform_indices = @transform_0, window_bounds = array<i64: 1, 1>}, {transform_indices = @transform_1, window_bounds = array<i64: 2, 8, 128>}, {transform_indices = @transform_2, window_bounds = array<i64: 1, 8, 128>}, {pipeline_mode = #tpu.pipeline_mode<synchronous>, transform_indices = @transform_3, window_bounds = array<i64: 1, 128>}, {transform_indices = @transform_4, window_bounds = array<i64: 1, 8, 128>}, {transform_indices = @transform_5, window_bounds = array<i64: 1, 8, 128>}]} {
    %c0_i32 = arith.constant 0 : i32
    %0 = arith.cmpi eq, %arg1, %c0_i32 : i32
    %1 = arith.extui %0 : i1 to i32
    %c0_i32_0 = arith.constant 0 : i32
    %2 = arith.cmpi ne, %1, %c0_i32_0 : i32
    scf.if %2 {
      %c0_14 = arith.constant 0 : index
      %c0_15 = arith.constant 0 : index
      %33 = memref.load %arg2[%c0_14, %c0_15] : memref<1x1xf32, #tpu.memory_space<smem>>
      %c0_16 = arith.constant 0 : index
      %c0_17 = arith.constant 0 : index
      %34 = vector.load %arg5[%c0_16, %c0_17] : memref<1x128xf32, #tpu.memory_space<vmem>>, vector<1x128xf32>
      %c0_18 = arith.constant 0 : index
      %c0_19 = arith.constant 0 : index
      %c0_20 = arith.constant 0 : index
      %35 = vector.load %arg3[%c0_18, %c0_19, %c0_20] : memref<2x8x128xf32, #tpu.memory_space<vmem>>, vector<1x8x128xf32>
      %36 = vector.shape_cast %35 : vector<1x8x128xf32> to vector<8x128xf32>
      %c1 = arith.constant 1 : index
      %c0_21 = arith.constant 0 : index
      %c0_22 = arith.constant 0 : index
      %37 = vector.load %arg3[%c1, %c0_21, %c0_22] : memref<2x8x128xf32, #tpu.memory_space<vmem>>, vector<1x8x128xf32>
      %38 = vector.shape_cast %37 : vector<1x8x128xf32> to vector<8x128xf32>
      %39 = vector.broadcast %34 : vector<1x128xf32> to vector<8x128xf32>
      %40 = arith.subf %36, %39 : vector<8x128xf32>
      %41 = vector.broadcast %33 : f32 to vector<8x128xf32>
      %42 = arith.mulf %40, %41 : vector<8x128xf32>
      %cst_23 = arith.constant dense<0xFF800000> : vector<8xf32>
      %43 = vector.multi_reduction <maximumf>, %42, %cst_23 [1] : vector<8x128xf32> to vector<8xf32>
      %44 = vector.shape_cast %43 : vector<8xf32> to vector<8x1xf32>
      %45 = vector.broadcast %44 : vector<8x1xf32> to vector<8x128xf32>
      %46 = arith.subf %42, %45 : vector<8x128xf32>
      %47 = math.exp %46 : vector<8x128xf32>
      %cst_24 = arith.constant dense<0.000000e+00> : vector<8xf32>
      %48 = vector.multi_reduction <add>, %47, %cst_24 [1] : vector<8x128xf32> to vector<8xf32>
      %49 = vector.shape_cast %48 : vector<8xf32> to vector<8x1xf32>
      %50 = tpu.reciprocal %49 : vector<8x1xf32> -> vector<8x1xf32>
      %51 = vector.broadcast %50 : vector<8x1xf32> to vector<8x128xf32>
      %52 = arith.mulf %47, %51 : vector<8x128xf32>
      %53 = vector.broadcast %34 : vector<1x128xf32> to vector<8x128xf32>
      %54 = arith.subf %38, %53 : vector<8x128xf32>
      %55 = vector.broadcast %33 : f32 to vector<8x128xf32>
      %56 = arith.mulf %54, %55 : vector<8x128xf32>
      %cst_25 = arith.constant dense<0xFF800000> : vector<8xf32>
      %57 = vector.multi_reduction <maximumf>, %56, %cst_25 [1] : vector<8x128xf32> to vector<8xf32>
      %58 = vector.shape_cast %57 : vector<8xf32> to vector<8x1xf32>
      %59 = vector.broadcast %58 : vector<8x1xf32> to vector<8x128xf32>
      %60 = arith.subf %56, %59 : vector<8x128xf32>
      %61 = math.exp %60 : vector<8x128xf32>
      %cst_26 = arith.constant dense<0.000000e+00> : vector<8xf32>
      %62 = vector.multi_reduction <add>, %61, %cst_26 [1] : vector<8x128xf32> to vector<8xf32>
      %63 = vector.shape_cast %62 : vector<8xf32> to vector<8x1xf32>
      %64 = tpu.reciprocal %63 : vector<8x1xf32> -> vector<8x1xf32>
      %65 = vector.broadcast %64 : vector<8x1xf32> to vector<8x128xf32>
      %66 = arith.mulf %61, %65 : vector<8x128xf32>
      %67 = arith.addf %52, %66 : vector<8x128xf32>
      %c0_27 = arith.constant 0 : index
      %c0_28 = arith.constant 0 : index
      %c0_29 = arith.constant 0 : index
      %68 = vector.load %arg8[%c0_27, %c0_28, %c0_29] : memref<3x8x128xf32, #tpu.memory_space<vmem>>, vector<1x8x128xf32>
      %69 = vector.shape_cast %68 : vector<1x8x128xf32> to vector<8x128xf32>
      %70 = vector.shape_cast %67 : vector<8x128xf32> to vector<1x8x128xf32>
      tpu.vector_store %arg8[%c0_27, %c0_28, %c0_29], %70 {strides = array<i32>} : memref<3x8x128xf32, #tpu.memory_space<vmem>>, vector<1x8x128xf32>,
      %c1_30 = arith.constant 1 : index
      %c0_31 = arith.constant 0 : index
      %c0_32 = arith.constant 0 : index
      %71 = vector.load %arg8[%c1_30, %c0_31, %c0_32] : memref<3x8x128xf32, #tpu.memory_space<vmem>>, vector<1x8x128xf32>
      %72 = vector.shape_cast %71 : vector<1x8x128xf32> to vector<8x128xf32>
      %73 = vector.shape_cast %52 : vector<8x128xf32> to vector<1x8x128xf32>
      tpu.vector_store %arg8[%c1_30, %c0_31, %c0_32], %73 {strides = array<i32>} : memref<3x8x128xf32, #tpu.memory_space<vmem>>, vector<1x8x128xf32>,
      %c2 = arith.constant 2 : index
      %c0_33 = arith.constant 0 : index
      %c0_34 = arith.constant 0 : index
      %74 = vector.load %arg8[%c2, %c0_33, %c0_34] : memref<3x8x128xf32, #tpu.memory_space<vmem>>, vector<1x8x128xf32>
      %75 = vector.shape_cast %74 : vector<1x8x128xf32> to vector<8x128xf32>
      %76 = vector.shape_cast %66 : vector<8x128xf32> to vector<1x8x128xf32>
      tpu.vector_store %arg8[%c2, %c0_33, %c0_34], %76 {strides = array<i32>} : memref<3x8x128xf32, #tpu.memory_space<vmem>>, vector<1x8x128xf32>,
      %cst_35 = arith.constant 0.000000e+00 : f32
      %77 = vector.broadcast %cst_35 : f32 to vector<8x1xf32>
      %c0_36 = arith.constant 0 : index
      %c0_37 = arith.constant 0 : index
      %78 = vector.load %arg9[%c0_36, %c0_37] : memref<8x1xf32, #tpu.memory_space<vmem>>, vector<8x1xf32>
      tpu.vector_store %arg9[%c0_36, %c0_37], %77 {strides = array<i32>} : memref<8x1xf32, #tpu.memory_space<vmem>>, vector<8x1xf32>,
      %cst_38 = arith.constant 0.000000e+00 : f32
      %79 = vector.broadcast %cst_38 : f32 to vector<8x128xf32>
      %80 = arith.addf %79, %36 : vector<8x128xf32>
      %81 = arith.addf %80, %38 : vector<8x128xf32>
      %c0_39 = arith.constant 0 : index
      %c0_40 = arith.constant 0 : index
      %c0_41 = arith.constant 0 : index
      %82 = vector.load %arg7[%c0_39, %c0_40, %c0_41] : memref<1x8x128xf32, #tpu.memory_space<vmem>>, vector<1x8x128xf32>
      %83 = vector.shape_cast %82 : vector<1x8x128xf32> to vector<8x128xf32>
      %84 = vector.shape_cast %81 : vector<8x128xf32> to vector<1x8x128xf32>
      tpu.vector_store %arg7[%c0_39, %c0_40, %c0_41], %84 {strides = array<i32>} : memref<1x8x128xf32, #tpu.memory_space<vmem>>, vector<1x8x128xf32>,
    } else {
    }
    %c0 = arith.constant 0 : index
    %c0_1 = arith.constant 0 : index
    %c0_2 = arith.constant 0 : index
    %3 = vector.load %arg4[%c0, %c0_1, %c0_2] : memref<1x8x128xf32, #tpu.memory_space<vmem>>, vector<1x8x128xf32>
    %4 = vector.shape_cast %3 : vector<1x8x128xf32> to vector<8x128xf32>
    %cst = arith.constant 1.000000e+01 : f32
    %5 = vector.broadcast %cst : f32 to vector<8x128xf32>
    %6 = arith.mulf %4, %5 : vector<8x128xf32>
    %cst_3 = arith.constant dense<0xFF800000> : vector<8xf32>
    %7 = vector.multi_reduction <maximumf>, %6, %cst_3 [1] : vector<8x128xf32> to vector<8xf32>
    %8 = vector.shape_cast %7 : vector<8xf32> to vector<8x1xf32>
    %9 = vector.broadcast %8 : vector<8x1xf32> to vector<8x128xf32>
    %10 = arith.subf %6, %9 : vector<8x128xf32>
    %11 = math.exp %10 : vector<8x128xf32>
    %cst_4 = arith.constant dense<0.000000e+00> : vector<8xf32>
    %12 = vector.multi_reduction <add>, %11, %cst_4 [1] : vector<8x128xf32> to vector<8xf32>
    %13 = vector.shape_cast %12 : vector<8xf32> to vector<8x1xf32>
    %14 = math.log %13 : vector<8x1xf32>
    %c0_5 = arith.constant 0 : index
    %c0_6 = arith.constant 0 : index
    %c0_7 = arith.constant 0 : index
    %15 = vector.load %arg8[%c0_5, %c0_6, %c0_7] : memref<3x8x128xf32, #tpu.memory_space<vmem>>, vector<1x8x128xf32>
    %16 = vector.shape_cast %15 : vector<1x8x128xf32> to vector<8x128xf32>
    %17 = arith.mulf %16, %6 : vector<8x128xf32>
    %cst_8 = arith.constant dense<0.000000e+00> : vector<8xf32>
    %18 = vector.multi_reduction <add>, %17, %cst_8 [1] : vector<8x128xf32> to vector<8xf32>
    %19 = vector.shape_cast %18 : vector<8xf32> to vector<8x1xf32>
    %20 = arith.addf %8, %14 : vector<8x1xf32>
    %cst_9 = arith.constant 2.000000e+00 : f32
    %21 = vector.broadcast %cst_9 : f32 to vector<8x1xf32>
    %22 = arith.mulf %21, %20 : vector<8x1xf32>
    %23 = arith.subf %19, %22 : vector<8x1xf32>
    %c2_i32 = arith.constant 2 : i32
    %24 = arith.cmpi slt, %arg1, %c2_i32 : i32
    %25 = arith.extui %24 : i1 to i32
    %c0_i32_10 = arith.constant 0 : i32
    %26 = arith.cmpi ne, %25, %c0_i32_10 : i32
    scf.if %26 {
      %c1_i32 = arith.constant 1 : i32
      %33 = arith.addi %c1_i32, %arg1 : i32
      %34 = arith.index_cast %33 : i32 to index
      %c0_14 = arith.constant 0 : index
      %c0_15 = arith.constant 0 : index
      %35 = vector.load %arg8[%34, %c0_14, %c0_15] : memref<3x8x128xf32, #tpu.memory_space<vmem>>, vector<1x8x128xf32>
      %36 = vector.shape_cast %35 : vector<1x8x128xf32> to vector<8x128xf32>
      %37 = arith.mulf %36, %6 : vector<8x128xf32>
      %cst_16 = arith.constant dense<0.000000e+00> : vector<8xf32>
      %38 = vector.multi_reduction <add>, %37, %cst_16 [1] : vector<8x128xf32> to vector<8xf32>
      %39 = vector.shape_cast %38 : vector<8xf32> to vector<8x1xf32>
      %c0_17 = arith.constant 0 : index
      %c0_18 = arith.constant 0 : index
      %40 = vector.load %arg9[%c0_17, %c0_18] : memref<8x1xf32, #tpu.memory_space<vmem>>, vector<8x1xf32>
      %41 = arith.addf %8, %14 : vector<8x1xf32>
      %42 = arith.subf %39, %41 : vector<8x1xf32>
      %43 = arith.subf %23, %42 : vector<8x1xf32>
      %44 = arith.addf %40, %43 : vector<8x1xf32>
      %c0_19 = arith.constant 0 : index
      %c0_20 = arith.constant 0 : index
      %45 = vector.load %arg9[%c0_19, %c0_20] : memref<8x1xf32, #tpu.memory_space<vmem>>, vector<8x1xf32>
      tpu.vector_store %arg9[%c0_19, %c0_20], %44 {strides = array<i32>} : memref<8x1xf32, #tpu.memory_space<vmem>>, vector<8x1xf32>,
    } else {
    }
    %c2_i32_11 = arith.constant 2 : i32
    %27 = arith.cmpi sge, %arg1, %c2_i32_11 : i32
    %28 = arith.extui %27 : i1 to i32
    %c0_i32_12 = arith.constant 0 : i32
    %29 = arith.cmpi ne, %28, %c0_i32_12 : i32
    scf.if %29 {
      %c0_14 = arith.constant 0 : index
      %c0_15 = arith.constant 0 : index
      %33 = vector.load %arg9[%c0_14, %c0_15] : memref<8x1xf32, #tpu.memory_space<vmem>>, vector<8x1xf32>
      %34 = arith.addf %33, %23 : vector<8x1xf32>
      %c0_16 = arith.constant 0 : index
      %c0_17 = arith.constant 0 : index
      %35 = vector.load %arg9[%c0_16, %c0_17] : memref<8x1xf32, #tpu.memory_space<vmem>>, vector<8x1xf32>
      tpu.vector_store %arg9[%c0_16, %c0_17], %34 {strides = array<i32>} : memref<8x1xf32, #tpu.memory_space<vmem>>, vector<8x1xf32>,
    } else {
    }
    %c3_i32 = arith.constant 3 : i32
    %30 = arith.cmpi eq, %arg1, %c3_i32 : i32
    %31 = arith.extui %30 : i1 to i32
    %c0_i32_13 = arith.constant 0 : i32
    %32 = arith.cmpi ne, %31, %c0_i32_13 : i32
    scf.if %32 {
      %c0_14 = arith.constant 0 : index
      %c0_15 = arith.constant 0 : index
      %33 = vector.load %arg9[%c0_14, %c0_15] : memref<8x1xf32, #tpu.memory_space<vmem>>, vector<8x1xf32>
      %34 = vector.shape_cast %33 : vector<8x1xf32> to vector<1x8x1xf32>
      %cst_16 = arith.constant dense<0.000000e+00> : vector<1xf32>
      %35 = vector.multi_reduction <add>, %34, %cst_16 [1, 2] : vector<1x8x1xf32> to vector<1xf32>
      %36 = vector.shape_cast %35 : vector<1xf32> to vector<1x1x1xf32>
      %37 = vector.extract %36[0, 0, 0] : f32 from vector<1x1x1xf32>
      %38 = vector.broadcast %37 : f32 to vector<8x128xf32>
      %c0_17 = arith.constant 0 : index
      %c0_18 = arith.constant 0 : index
      %c0_19 = arith.constant 0 : index
      %39 = vector.load %arg6[%c0_17, %c0_18, %c0_19] : memref<1x8x128xf32, #tpu.memory_space<vmem>>, vector<1x8x128xf32>
      %40 = vector.shape_cast %39 : vector<1x8x128xf32> to vector<8x128xf32>
      %41 = vector.shape_cast %38 : vector<8x128xf32> to vector<1x8x128xf32>
      tpu.vector_store %arg6[%c0_17, %c0_18, %c0_19], %41 {strides = array<i32>} : memref<1x8x128xf32, #tpu.memory_space<vmem>>, vector<1x8x128xf32>,
    } else {
    }
    return
  }
  func.func @transform_0(%arg0: i32, %arg1: i32) -> (i32, i32) {
    %c0_i32 = arith.constant 0 : i32
    %c0_i32_0 = arith.constant 0 : i32
    %c0_i32_1 = arith.constant 0 : i32
    return %c0_i32, %c0_i32_0 : i32, i32
  }
  func.func @transform_1(%arg0: i32, %arg1: i32) -> (i32, i32, i32) {
    %c0_i32 = arith.constant 0 : i32
    %c0_i32_0 = arith.constant 0 : i32
    %c0_i32_1 = arith.constant 0 : i32
    return %c0_i32, %arg0, %c0_i32_0 : i32, i32, i32
  }
  func.func @transform_2(%arg0: i32, %arg1: i32) -> (i32, i32, i32) {
    %c0_i32 = arith.constant 0 : i32
    %c0_i32_0 = arith.constant 0 : i32
    return %arg1, %arg0, %c0_i32 : i32, i32, i32
  }
  func.func @transform_3(%arg0: i32, %arg1: i32) -> (i32, i32) {
    %c0_i32 = arith.constant 0 : i32
    %c0_i32_0 = arith.constant 0 : i32
    %c0_i32_1 = arith.constant 0 : i32
    return %c0_i32, %c0_i32_0 : i32, i32
  }
  func.func @transform_4(%arg0: i32, %arg1: i32) -> (i32, i32, i32) {
    %c0_i32 = arith.constant 0 : i32
    %c0_i32_0 = arith.constant 0 : i32
    %c0_i32_1 = arith.constant 0 : i32
    return %arg0, %c0_i32, %c0_i32_0 : i32, i32, i32
  }
  func.func @transform_5(%arg0: i32, %arg1: i32) -> (i32, i32, i32) {
    %c0_i32 = arith.constant 0 : i32
    %c0_i32_0 = arith.constant 0 : i32
    %c0_i32_1 = arith.constant 0 : i32
    return %arg0, %c0_i32, %c0_i32_0 : i32, i32, i32
  }
}

</mosaic_0001>

<llo_original>
// kernel: _dino_forward.1
$region0: #{_dino_forward.1}
  #allocation0 [shape = 'u32[]', space=smem, size = 0x4, offset = 0x4, fixed_abs, tag = 'smem constant byte address 0x4 - core index']
  #allocation1 [shape = 'u32[144,128]{1,0:T(1,128)}', space=vmem, size = 0x12000, scoped, tag = 'internal scratch']
  #allocation2 [shape = 'f32[3,8,128]{2,1,0:T(8,128)}', space=vmem, size = 0x3000, scoped, tag = 'scratch operand']
  #allocation3 [shape = 'f32[8,1]{1,0:T(8,128)}', space=vmem, size = 0x1000, scoped, tag = 'scratch operand']
  #allocation4 [shape = 'f32[1,1]{1,0:T(1,128)S(6)}', space=smem, size = 0x200, scoped, tag = 'scoped memory for _dino_forward.1']
  %s0 = inlined_call_operand.<no memory space> [shape: f32[1,1], index: 0, kind: input, shape index: {}]
  %s1 = inlined_call_operand.hbm [shape: f32[2,16,128], index: 1, kind: input, shape index: {}]
  %s2 = inlined_call_operand.hbm [shape: f32[4,16,128], index: 2, kind: input, shape index: {}]
  %s3 = inlined_call_operand.hbm [shape: f32[1,128], index: 3, kind: input, shape index: {}]
  %s4 = inlined_call_operand.hbm [shape: f32[2,8,128], index: 4, kind: output, shape index: {0}]
  %s5 = inlined_call_operand.hbm [shape: f32[2,8,128], index: 5, kind: output, shape index: {1}]
  %6 = xla_tuple %s4, %s5
  %s7 = sld [smem:[#allocation0]]
  $region85: #{_dino_forward.1} parent=0
    _
  %s9 = ssub.s32 1, %s7
  %s10 = scalar_select 0, %s9, %s7
  %11 = sst [smem:[#allocation4]] %s0
  $region1: #{_dino_forward.1} parent=0
    #allocation5 [shape = 'u8[16384]{0}', space=vmem, size = 0x4000, scoped, tag = 'input window, operand 1']
    #allocation6 [shape = 's32[2]{0}', space=sflag, size = 0x8, scoped, tag = 'scoped memory for _dino_forward.1']
    #allocation7 [shape = 's32[2]{0}', space=sflag, size = 0x8, scoped, tag = 'scoped memory for _dino_forward.1']
    #allocation8 [shape = 'u8[8192]{0}', space=vmem, size = 0x2000, scoped, tag = 'input window, operand 2']
    #allocation9 [shape = 's32[2]{0}', space=sflag, size = 0x8, scoped, tag = 'scoped memory for _dino_forward.1']
    #allocation10 [shape = 'u8[512]{0}', space=vmem, size = 0x400, scoped, tag = 'input window, operand 3, single buffered']
    #allocation11 [shape = 'u8[8192]{0}', space=vmem, size = 0x2000, scoped, tag = 'output window, operand 0']
    #allocation12 [shape = 'u8[8192]{0}', space=vmem, size = 0x2000, scoped, tag = 'output window, operand 1']
    #allocation13 [shape = 's32[2]{0}', space=sflag, size = 0x8, scoped, tag = 'scoped memory for _dino_forward.1']
    %12 = vsyncpa [#allocation6], 0
    %s13 = scalar_lea.sflag [#allocation6], 1
    %14 = vsyncpa %s13, 0
    %15 = vsyncpa [#allocation9], 0
    %s16 = scalar_lea.sflag [#allocation9], 1
    %17 = vsyncpa %s16, 0
    %18 = vsyncpa [#allocation7], 0
    %s19 = scalar_lea.sflag [#allocation7], 1
    %20 = vsyncpa %s19, 0
    %21 = vsyncpa [#allocation13], 0
    %s22 = scalar_lea.sflag [#allocation13], 1
    %23 = vsyncpa %s22, 0
    loop: start=0, step=1, limit=10
    $region2: #{_dino_forward.1} parent=1 // loop_pre_header
      _
    $region3: #{_dino_forward.1} parent=1 // loop_header
      %s25 = sphi 0, %s29
      %p26 = scmp.ge.s32.totalorder %s25, 10
      %s32 = sphi 0, %s44
      %s33 = sphi 0, %s40
      %s34 = sphi 0, %s32
      %s35 = sphi 0, %s33
      %s36 = sphi 0, %s34
      %s37 = sphi 0, %s35
      %s45 = sphi 0, %s45
      %s47 = sphi 0, %s45
      %s48 = sphi 0, %s47
      %s62 = sphi 0, %s48
      %s68 = sphi 0, %s70
      %s71 = sphi 0, %s68
      %s72 = sphi 0, %s71
      %s88 = sphi 0, %s72
      %s96 = sphi 0, %s98
      %s99 = sphi 0, %s96
      %s100 = sphi 0, %s99
      %s116 = sphi 0, %s100
      %s120 = sphi 0, %s120
      %s122 = sphi 0, %s120
      %s123 = sphi 0, %s122
      %s137 = sphi 0, %s123
      %s143 = sphi 0, %s145
      %s146 = sphi 0, %s143
      %s147 = sphi 0, %s146
      %s163 = sphi 0, %s147
      %s169 = sphi 0, %s171
      %s172 = sphi 0, %s169
      %s173 = sphi 0, %s172
      %s189 = sphi 0, %s173
    $region4: #{_dino_forward.1} parent=1 // loop_header_branch
      %28 = sbr.rel (%p26) target = $region8
    $region5: #{_dino_forward.1} parent=1 // loop_body
      %s30 = ssub.s32 %s25, 1
      %s31 = ssub.s32 %s25, 2
      %s38 = sadd.s32 1, %s33
      %p39 = scmp.ge.s32.totalorder %s38, 4
      %s40 = scalar_select %p39, 0, %s38
      %s41 = sadd.s32 1, %s32
      %s42 = scalar_select %p39, %s41, %s32
      %p43 = scmp.ge.s32.totalorder %s42, 2
      %s44 = scalar_select %p43, 0, %s42
      %s46 = sadd.s32 %s45, 1
      %p49 = scmp.eq.s32.totalorder %s25, 7
      %p50 = scmp.ne.s32.totalorder %s45, %s47
      %p51 = scmp.eq.s32.totalorder %s25, 0
      %p52 = por %p50, %p51
      %p53 = scmp.ne.s32.totalorder %s45, %s47
      %p54 = scmp.eq.s32.totalorder %s30, 7
      %p55 = por %p53, %p54
      %p56 = scmp.ne.s32.totalorder %s47, %s48
      %p57 = scmp.eq.s32.totalorder %s30, 0
      %p58 = por %p56, %p57
      %p59 = scmp.ne.s32.totalorder %s47, %s48
      %p60 = scmp.eq.s32.totalorder %s31, 7
      %p61 = por %p59, %p60
      %p63 = scmp.ne.s32.totalorder %s48, %s62
      %p64 = scmp.eq.s32.totalorder %s31, 0
      %p65 = por %p63, %p64
      %s66 = ssub.s32 %s32, %s44
      %p67 = scmp.eq.s32.totalorder %s66, 0
      %s69 = sadd.s32 %s68, 1
      %s70 = scalar_select %p67, %s68, %s69
      %p73 = pneg %p67
      %p74 = scmp.eq.s32.totalorder %s25, 7
      %p75 = por %p73, %p74
      %p76 = scmp.ne.s32.totalorder %s68, %s71
      %p77 = scmp.eq.s32.totalorder %s25, 0
      %p78 = por %p76, %p77
      %p79 = scmp.ne.s32.totalorder %s68, %s71
      %p80 = scmp.eq.s32.totalorder %s30, 7
      %p81 = por %p79, %p80
      %p82 = scmp.ne.s32.totalorder %s71, %s72
      %p83 = scmp.eq.s32.totalorder %s30, 0
      %p84 = por %p82, %p83
      %p85 = scmp.ne.s32.totalorder %s71, %s72
      %p86 = scmp.eq.s32.totalorder %s31, 7
      %p87 = por %p85, %p86
      %p89 = scmp.ne.s32.totalorder %s72, %s88
      %p90 = scmp.eq.s32.totalorder %s31, 0
      %p91 = por %p89, %p90
      %s92 = ssub.s32 %s33, %s40
      %s93 = ssub.s32 %s32, %s44
      %s94 = sor.u32 %s92, %s93
      %p95 = scmp.eq.s32.totalorder %s94, 0
      %s97 = sadd.s32 %s96, 1
      %s98 = scalar_select %p95, %s96, %s97
      %p101 = pneg %p95
      %p102 = scmp.eq.s32.totalorder %s25, 7
      %p103 = por %p101, %p102
      %p104 = scmp.ne.s32.totalorder %s96, %s99
      %p105 = scmp.eq.s32.totalorder %s25, 0
      %p106 = por %p104, %p105
      %p107 = scmp.ne.s32.totalorder %s96, %s99
      %p108 = scmp.eq.s32.totalorder %s30, 7
      %p109 = por %p107, %p108
      %p110 = scmp.ne.s32.totalorder %s99, %s100
      %p111 = scmp.eq.s32.totalorder %s30, 0
      %p112 = por %p110, %p111
      %p113 = scmp.ne.s32.totalorder %s99, %s100
      %p114 = scmp.eq.s32.totalorder %s31, 7
      %p115 = por %p113, %p114
      %p117 = scmp.ne.s32.totalorder %s100, %s116
      %p118 = scmp.eq.s32.totalorder %s31, 0
      %p119 = por %p117, %p118
      %s121 = sadd.s32 %s120, 1
      %p124 = scmp.eq.s32.totalorder %s25, 7
      %p125 = scmp.ne.s32.totalorder %s120, %s122
      %p126 = scmp.eq.s32.totalorder %s25, 0
      %p127 = por %p125, %p126
      %p128 = scmp.ne.s32.totalorder %s120, %s122
      %p129 = scmp.eq.s32.totalorder %s30, 7
      %p130 = por %p128, %p129
      %p131 = scmp.ne.s32.totalorder %s122, %s123
      %p132 = scmp.eq.s32.totalorder %s30, 0
      %p133 = por %p131, %p132
      %p134 = scmp.ne.s32.totalorder %s122, %s123
      %p135 = scmp.eq.s32.totalorder %s31, 7
      %p136 = por %p134, %p135
      %p138 = scmp.ne.s32.totalorder %s123, %s137
      %p139 = scmp.eq.s32.totalorder %s31, 0
      %p140 = por %p138, %p139
      %s141 = ssub.s32 %s32, %s44
      %p142 = scmp.eq.s32.totalorder %s141, 0
      %s144 = sadd.s32 %s143, 1
      %s145 = scalar_select %p142, %s143, %s144
      %p148 = pneg %p142
      %p149 = scmp.eq.s32.totalorder %s25, 7
      %p150 = por %p148, %p149
      %p151 = scmp.ne.s32.totalorder %s143, %s146
      %p152 = scmp.eq.s32.totalorder %s25, 0
      %p153 = por %p151, %p152
      %p154 = scmp.ne.s32.totalorder %s143, %s146
      %p155 = scmp.eq.s32.totalorder %s30, 7
      %p156 = por %p154, %p155
      %p157 = scmp.ne.s32.totalorder %s146, %s147
      %p158 = scmp.eq.s32.totalorder %s30, 0
      %p159 = por %p157, %p158
      %p160 = scmp.ne.s32.totalorder %s146, %s147
      %p161 = scmp.eq.s32.totalorder %s31, 7
      %p162 = por %p160, %p161
      %p164 = scmp.ne.s32.totalorder %s147, %s163
      %p165 = scmp.eq.s32.totalorder %s31, 0
      %p166 = por %p164, %p165
      %s167 = ssub.s32 %s32, %s44
      %p168 = scmp.eq.s32.totalorder %s167, 0
      %s170 = sadd.s32 %s169, 1
      %s171 = scalar_select %p168, %s169, %s170
      %p174 = pneg %p168
      %p175 = scmp.eq.s32.totalorder %s25, 7
      %p176 = por %p174, %p175
      %p177 = scmp.ne.s32.totalorder %s169, %s172
      %p178 = scmp.eq.s32.totalorder %s25, 0
      %p179 = por %p177, %p178
      %p180 = scmp.ne.s32.totalorder %s169, %s172
      %p181 = scmp.eq.s32.totalorder %s30, 7
      %p182 = por %p180, %p181
      %p183 = scmp.ne.s32.totalorder %s172, %s173
      %p184 = scmp.eq.s32.totalorder %s30, 0
      %p185 = por %p183, %p184
      %p186 = scmp.ne.s32.totalorder %s172, %s173
      %p187 = scmp.eq.s32.totalorder %s31, 7
      %p188 = por %p186, %p187
      %p190 = scmp.ne.s32.totalorder %s173, %s189
      %p191 = scmp.eq.s32.totalorder %s31, 0
      %p192 = por %p190, %p191
      %p193 = scmp.le.s32.totalorder 1, %s25
      %p194 = scmp.lt.s32.totalorder %s25, 9
      %p195 = pnand %p193, %p194
      %p196 = pneg %p195
      // Predicated region
      $region9: #{_dino_forward.1} parent=5 // pred_check
        _
      $region10: #{_dino_forward.1} parent=5 // pred_check_branch
        %198 = sbr.rel (%p195) target = $region12
      $region11: #{_dino_forward.1} parent=5 // pred_region
        %s199 = ssub.s32 %s25, 1
        // Predicated region
        $region13: #{_dino_forward.1} parent=11 // pred_check
          %p200 = pneg %p58
        $region14: #{_dino_forward.1} parent=11 // pred_check_branch
          %202 = sbr.rel (%p200) target = $region16
        $region15: #{_dino_forward.1} parent=11 // pred_region
          _
        $region16: #{_dino_forward.1} parent=11 // pred_fallthru
          _
        // Predicated region
        $region17: #{_dino_forward.1} parent=11 // pred_check
          %p203 = pneg %p133
        $region18: #{_dino_forward.1} parent=11 // pred_check_branch
          %205 = sbr.rel (%p203) target = $region20
        $region19: #{_dino_forward.1} parent=11 // pred_region
          %s207 = ssub.s32 16, 16
          %208 = vsyncadd [#allocation9], %s207
          %s210 = sshll.u32 [#allocation10], 4
          %s211 = int_to_ptr.vmem [resolvable:$true] %s210
          %213 = dma.hbm_to_vmem [thread:$0]  %s3, 16, %s211, [#allocation9]
        $region20: #{_dino_forward.1} parent=11 // pred_fallthru
          _
      $region12: #{_dino_forward.1} parent=5 // pred_fallthru
        _
      %p214 = scmp.lt.s32.totalorder %s25, 8
      // Predicated region
      $region21: #{_dino_forward.1} parent=5 // pred_check
        %p215 = pneg %p214
      $region22: #{_dino_forward.1} parent=5 // pred_check_branch
        %217 = sbr.rel (%p215) target = $region24
      $region23: #{_dino_forward.1} parent=5 // pred_region
        // Predicated region
        $region25: #{_dino_forward.1} parent=23 // pred_check
          %p218 = pneg %p78
        $region26: #{_dino_forward.1} parent=23 // pred_check_branch
          %220 = sbr.rel (%p218) target = $region28
        $region27: #{_dino_forward.1} parent=23 // pred_region
          %s221 = sand.u32 %s68, 1
          %s222 = scalar_lea.sflag [#allocation6], %s221
          %s223 = sand.u32 %s68, 1
          %s224 = smul.addr %s223, 16
          %s225 = scalar_lea.vmem [#allocation5], %s224
          %s227 = ssub.s32 256, 256
          %228 = vsyncadd %s222, %s227
          %s229 = smul.addr %s32, 128
          %s230 = scalar_lea.hbm %s1, %s229
          %s231 = sshll.u32 %s225, 4
          %s232 = int_to_ptr.vmem [resolvable:$true] %s231
          %237 = dma.hbm_to_vmem [thread:$0]  %s230, 256, %s232, %s222, 256, 128, 8
        $region28: #{_dino_forward.1} parent=23 // pred_fallthru
          _
        // Predicated region
        $region29: #{_dino_forward.1} parent=23 // pred_check
          %p238 = pneg %p106
        $region30: #{_dino_forward.1} parent=23 // pred_check_branch
          %240 = sbr.rel (%p238) target = $region32
        $region31: #{_dino_forward.1} parent=23 // pred_region
          %s241 = sand.u32 %s25, 1
          %s242 = scalar_lea.sflag [#allocation9], %s241
          %s243 = sand.u32 %s96, 1
          %s244 = smul.addr %s243, 8
          %s245 = scalar_lea.vmem [#allocation8], %s244
          %s247 = ssub.s32 128, 128
          %248 = vsyncadd %s242, %s247
          %s249 = smul.addr %s33, 2
          %s250 = sadd.s32 %s32, %s249
          %s251 = smul.addr %s250, 128
          %s252 = scalar_lea.hbm %s2, %s251
          %s254 = sshll.u32 %s245, 4
          %s255 = int_to_ptr.vmem [resolvable:$true] %s254
          %257 = dma.hbm_to_vmem [thread:$0]  %s252, 128, %s255, %s242
        $region32: #{_dino_forward.1} parent=23 // pred_fallthru
          _
      $region24: #{_dino_forward.1} parent=5 // pred_fallthru
        _
      %p258 = scmp.le.s32.totalorder 1, %s25
      %p259 = scmp.lt.s32.totalorder %s25, 9
      %p260 = pnand %p258, %p259
      %p261 = pneg %p260
      // Predicated region
      $region33: #{_dino_forward.1} parent=5 // pred_check
        _
      $region34: #{_dino_forward.1} parent=5 // pred_check_branch
        %263 = sbr.rel (%p260) target = $region36
      $region35: #{_dino_forward.1} parent=5 // pred_region
        %s264 = ssub.s32 %s25, 1
        %s265 = sand.u32 %s71, 1
        %s266 = scalar_lea.sflag [#allocation6], %s265
        %s267 = sand.u32 %s71, 1
        %s268 = smul.addr %s267, 16
        %s269 = scalar_lea.vmem [#allocation5], %s268
        // Predicated region
        $region37: #{_dino_forward.1} parent=35 // pred_check
          %p270 = pneg %p84
        $region38: #{_dino_forward.1} parent=35 // pred_check_branch
          %272 = sbr.rel (%p270) target = $region40
        $region39: #{_dino_forward.1} parent=35 // pred_region
          %273 = dma.done %s266, 256
        $region40: #{_dino_forward.1} parent=35 // pred_fallthru
          _
        %s274 = sand.u32 %s30, 1
        %s275 = scalar_lea.sflag [#allocation9], %s274
        %s276 = sand.u32 %s99, 1
        %s277 = smul.addr %s276, 8
        %s278 = scalar_lea.vmem [#allocation8], %s277
        // Predicated region
        $region41: #{_dino_forward.1} parent=35 // pred_check
          %p279 = pneg %p112
        $region42: #{_dino_forward.1} parent=35 // pred_check_branch
          %281 = sbr.rel (%p279) target = $region44
        $region43: #{_dino_forward.1} parent=35 // pred_region
          %282 = dma.done %s275, 128
        $region44: #{_dino_forward.1} parent=35 // pred_fallthru
          _
        // Predicated region
        $region45: #{_dino_forward.1} parent=35 // pred_check
          %p283 = pneg %p133
        $region46: #{_dino_forward.1} parent=35 // pred_check_branch
          %285 = sbr.rel (%p283) target = $region48
        $region47: #{_dino_forward.1} parent=35 // pred_region
          %286 = dma.done [#allocation9], 16
        $region48: #{_dino_forward.1} parent=35 // pred_fallthru
          _
        %p287 = pneg %p58
        %p288 = pneg %p55
        %s289 = sand.u32 %s71, 1
        %s290 = scalar_lea.sflag [#allocation6], %s289
        %s291 = sand.u32 %s71, 1
        %s292 = smul.addr %s291, 16
        %s293 = scalar_lea.vmem [#allocation5], %s292
        %p294 = pneg %p84
        %p295 = pneg %p81
        %s296 = sand.u32 %s30, 1
        %s297 = scalar_lea.sflag [#allocation9], %s296
        %s298 = sand.u32 %s99, 1
        %s299 = smul.addr %s298, 8
        %s300 = scalar_lea.vmem [#allocation8], %s299
        %p301 = pneg %p112
        %p302 = pneg %p109
        %p303 = pneg %p133
        %p304 = pneg %p130
        %p305 = pneg %p159
        %p306 = pneg %p156
        %s307 = sand.u32 %s146, 1
        %s308 = scalar_lea.sflag [#allocation7], %s307
        %s309 = sand.u32 %s146, 1
        %s310 = smul.addr %s309, 8
        %s311 = scalar_lea.vmem [#allocation11], %s310
        %p312 = pneg %p185
        %p313 = pneg %p182
        %s314 = sand.u32 %s172, 1
        %s315 = scalar_lea.sflag [#allocation13], %s314
        %s316 = sand.u32 %s172, 1
        %s317 = smul.addr %s316, 8
        %s318 = scalar_lea.vmem [#allocation12], %s317
        %p319 = scmp.eq.s32.totalorder %s35, 0
        // Predicated region
        $region49: #{_dino_forward.1} parent=35 // pred_check
          %p320 = pneg %p319
        $region50: #{_dino_forward.1} parent=35 // pred_check_branch
          %322 = sbr.rel (%p320) target = $region52
        $region51: #{_dino_forward.1} parent=35 // pred_region
          %s323 = sld [smem:[#allocation4]]
          %v324 = vld [vmem:[#allocation10] sm:$0x1]
          %v325 = vld [vmem:[%s269] sm:$0xff]
          %s326 = scalar_lea.vmem %s269, 8 [#allocation5]
          %v327 = vld [vmem:[%s326] sm:$0xff]
          %v329 = vlaneseq
          %v330 = vshrl.u32 %v329, 7
          %v331 = vsub.s32 0, %v330
          %v332 = vrot.slane %v324, %v331
          %v334 = vsub.f32 %v325, %v332
          %v335 = vstv %s323
          %v336 = vmul.f32 %v334, %v335
          %337 = vmax.xlane.f32.xlu0 %v336
          %v338 = vpop.xlane.xlu0 %337
          %v339 = vsub.f32 %v336, %v338
          %v340 = vmul.f32 %v339, 1.442695
          %v341 = vpow.pop %v340
          %342 = vadd.xlane.f32.xlu0 %v341
          %v343 = vpop.xlane.xlu0 %342
          %v344 = vrcp.pop %v343
          %v345 = vmul.f32 %v341, %v344
          %v346 = vsub.f32 %v327, %v332
          %v347 = vmul.f32 %v346, %v335
          %348 = vmax.xlane.f32.xlu0 %v347
          %v349 = vpop.xlane.xlu0 %348
          %v350 = vsub.f32 %v347, %v349
          %v351 = vmul.f32 %v350, 1.442695
          %v352 = vpow.pop %v351
          %353 = vadd.xlane.f32.xlu0 %v352
          %v354 = vpop.xlane.xlu0 %353
          %v355 = vrcp.pop %v354
          %v356 = vmul.f32 %v352, %v355
          %v357 = vadd.f32 %v345, %v356
          %358 = vst [vmem:[#allocation2] sm:$0xff] %v357
          %s359 = scalar_lea.vmem [#allocation2], 8
          %360 = vst [vmem:[%s359] sm:$0xff] %v345
          %s361 = scalar_lea.vmem [#allocation2], 16
          %362 = vst [vmem:[%s361] sm:$0xff] %v356
          %vm363 = vcmask 7168
          %364 = vst.msk [vmem:[#allocation3] sm:$0xff] %vm363, 0.0
          %v365 = vadd.f32 %v325, 0.0
          %v366 = vadd.f32 %v365, %v327
          %367 = vst [vmem:[%s318] sm:$0xff] %v366
        $region52: #{_dino_forward.1} parent=35 // pred_fallthru
          _
        %v368 = vld [vmem:[%s278] sm:$0xff]
        %v369 = vmul.f32 %v368, 10.0
        %370 = vmax.xlane.f32.xlu0 %v369
        %v371 = vpop.xlane.xlu0 %370
        %v372 = vsub.f32 %v369, %v371
        %v373 = vmul.f32 %v372, 1.442695
        %v374 = vpow.pop %v373
        %375 = vadd.xlane.f32.xlu0 %v374
        %v376 = vpop.xlane.xlu0 %375
        %v377 = vlog2.pop %v376
        %v378 = vmul.f32 %v377, 0.6931472
        %v379 = vld [vmem:[#allocation2] sm:$0xff]
        %v380 = vmul.f32 %v379, %v369
        %381 = vadd.xlane.f32.xlu0 %v380
        %v382 = vpop.xlane.xlu0 %381
        %v383 = vadd.f32 %v371, %v378
        %v384 = vmul.f32 %v383, 2.0
        %v385 = vsub.f32 %v382, %v384
        %p386 = scmp.lt.s32.totalorder %s35, 2
        // Predicated region
        $region53: #{_dino_forward.1} parent=35 // pred_check
          %p387 = pneg %p386
        $region54: #{_dino_forward.1} parent=35 // pred_check_branch
          %389 = sbr.rel (%p387) target = $region56
        $region55: #{_dino_forward.1} parent=35 // pred_region
          %s390 = sadd.s32 %s35, 1
          %s391 = smul.u32 %s390, 8
          %s392 = scalar_lea.vmem [#allocation2], %s391
          %v393 = vld [vmem:[%s392] sm:$0xff]
          %v394 = vmul.f32 %v393, %v369
          %395 = vadd.xlane.f32.xlu0 %v394
          %v396 = vpop.xlane.xlu0 %395
          %v397 = vld [vmem:[#allocation3] sm:$0xff]
          %v398 = vsub.f32 %v396, %v383
          %v399 = vsub.f32 %v385, %v398
          %v400 = vadd.f32 %v397, %v399
          %vm401 = vcmask 7168
          %402 = vst.msk [vmem:[#allocation3] sm:$0xff] %vm401, %v400
        $region56: #{_dino_forward.1} parent=35 // pred_fallthru
          _
        %p403 = scmp.ge.s32.totalorder %s35, 2
        // Predicated region
        $region57: #{_dino_forward.1} parent=35 // pred_check
          %p404 = pneg %p403
        $region58: #{_dino_forward.1} parent=35 // pred_check_branch
          %406 = sbr.rel (%p404) target = $region60
        $region59: #{_dino_forward.1} parent=35 // pred_region
          %v407 = vld [vmem:[#allocation3] sm:$0xff]
          %v408 = vadd.f32 %v407, %v385
          %vm409 = vcmask 7168
          %410 = vst.msk [vmem:[#allocation3] sm:$0xff] %vm409, %v408
        $region60: #{_dino_forward.1} parent=35 // pred_fallthru
          _
        %p411 = scmp.eq.s32.totalorder %s35, 3
        // Predicated region
        $region61: #{_dino_forward.1} parent=35 // pred_check
          %p412 = pneg %p411
        $region62: #{_dino_forward.1} parent=35 // pred_check_branch
          %414 = sbr.rel (%p412) target = $region64
        $region63: #{_dino_forward.1} parent=35 // pred_region
          %v415 = vld [vmem:[#allocation3] sm:$0xff]
          %vm416 = vcmask 7168
          %v417 = vsel %vm416, %v415, 0.0
          %418 = vadd.xlane.f32.xlu0 %v417
          %v419 = vpop.xlane.xlu0 %418
          %v420 = vrot.slane %v419, 4
          %v421 = vadd.f32 %v419, %v420
          %v422 = vrot.slane %v421, 2
          %v423 = vadd.f32 %v421, %v422
          %v424 = vrot.slane %v423, 1
          %v425 = vadd.f32 %v423, %v424
          %s426 = vtos %v425
          %v427 = vstv %s426
          %428 = vst [vmem:[%s311] sm:$0xff] %v427
        $region64: #{_dino_forward.1} parent=35 // pred_fallthru
          _
        %s429 = sand.u32 %s146, 1
        %s430 = scalar_lea.sflag [#allocation7], %s429
        %s431 = sand.u32 %s146, 1
        %s432 = smul.addr %s431, 8
        %s433 = scalar_lea.vmem [#allocation11], %s432
        %s434 = sand.u32 %s172, 1
        %s435 = scalar_lea.sflag [#allocation13], %s434
        %s436 = sand.u32 %s172, 1
        %s437 = smul.addr %s436, 8
        %s438 = scalar_lea.vmem [#allocation12], %s437
        // Predicated region
        $region65: #{_dino_forward.1} parent=35 // pred_check
          %p439 = pneg %p156
        $region66: #{_dino_forward.1} parent=35 // pred_check_branch
          %441 = sbr.rel (%p439) target = $region68
        $region67: #{_dino_forward.1} parent=35 // pred_region
          %s443 = ssub.s32 128, 128
          %444 = vsyncadd %s430, %s443
          %s445 = smul.addr %s34, 128
          %s446 = scalar_lea.hbm %s4, %s445
          %s448 = sshll.u32 %s433, 4
          %s449 = int_to_ptr.vmem [resolvable:$true] %s448
          %451 = dma.vmem_to_hbm [thread:$0]  %s449, 128, %s446, %s430
        $region68: #{_dino_forward.1} parent=35 // pred_fallthru
          _
        // Predicated region
        $region69: #{_dino_forward.1} parent=35 // pred_check
          %p452 = pneg %p182
        $region70: #{_dino_forward.1} parent=35 // pred_check_branch
          %454 = sbr.rel (%p452) target = $region72
        $region71: #{_dino_forward.1} parent=35 // pred_region
          %s456 = ssub.s32 128, 128
          %457 = vsyncadd %s435, %s456
          %s458 = smul.addr %s34, 128
          %s459 = scalar_lea.hbm %s5, %s458
          %s461 = sshll.u32 %s438, 4
          %s462 = int_to_ptr.vmem [resolvable:$true] %s461
          %464 = dma.vmem_to_hbm [thread:$0]  %s462, 128, %s459, %s435
        $region72: #{_dino_forward.1} parent=35 // pred_fallthru
          _
      $region36: #{_dino_forward.1} parent=5 // pred_fallthru
        _
      %p465 = scmp.le.s32.totalorder 2, %s25
      // Predicated region
      $region73: #{_dino_forward.1} parent=5 // pred_check
        %p466 = pneg %p465
      $region74: #{_dino_forward.1} parent=5 // pred_check_branch
        %468 = sbr.rel (%p466) target = $region76
      $region75: #{_dino_forward.1} parent=5 // pred_region
        %s469 = ssub.s32 %s25, 2
        // Predicated region
        $region77: #{_dino_forward.1} parent=75 // pred_check
          %p470 = pneg %p162
        $region78: #{_dino_forward.1} parent=75 // pred_check_branch
          %472 = sbr.rel (%p470) target = $region80
        $region79: #{_dino_forward.1} parent=75 // pred_region
          %s473 = sand.u32 %s147, 1
          %s474 = scalar_lea.sflag [#allocation7], %s473
          %s475 = sand.u32 %s147, 1
          %s476 = smul.addr %s475, 8
          %s477 = scalar_lea.vmem [#allocation11], %s476
          %478 = dma.done %s474, 128
        $region80: #{_dino_forward.1} parent=75 // pred_fallthru
          _
        // Predicated region
        $region81: #{_dino_forward.1} parent=75 // pred_check
          %p479 = pneg %p188
        $region82: #{_dino_forward.1} parent=75 // pred_check_branch
          %481 = sbr.rel (%p479) target = $region84
        $region83: #{_dino_forward.1} parent=75 // pred_region
          %s482 = sand.u32 %s173, 1
          %s483 = scalar_lea.sflag [#allocation13], %s482
          %s484 = sand.u32 %s173, 1
          %s485 = smul.addr %s484, 8
          %s486 = scalar_lea.vmem [#allocation12], %s485
          %487 = dma.done %s483, 128
        $region84: #{_dino_forward.1} parent=75 // pred_fallthru
          _
      $region76: #{_dino_forward.1} parent=5 // pred_fallthru
        _
    $region6: #{_dino_forward.1} parent=1 // loop_footer
      %s29 = sadd.s32 1, %s25
    $region7: #{_dino_forward.1} parent=1 // loop_footer_branch
      %24 = sbr.rel target = $region3
    $region8: #{_dino_forward.1} parent=1 // loop_exit
      _
    %488 = vsyncpa [#allocation6], 1
    %s489 = scalar_lea.sflag [#allocation6], 1
    %490 = vsyncpa %s489, 1
    %491 = vsyncpa [#allocation9], 1
    %s492 = scalar_lea.sflag [#allocation9], 1
    %493 = vsyncpa %s492, 1
    %494 = vsyncpa [#allocation7], 1
    %s495 = scalar_lea.sflag [#allocation7], 1
    %496 = vsyncpa %s495, 1
    %497 = vsyncpa [#allocation13], 1
    %s498 = scalar_lea.sflag [#allocation13], 1
    %499 = vsyncpa %s498, 1

</llo_original>
